<compile_context>
chip_gen: v6e
topology: v6e:2x2x1
jax: 0.10.0
libtpu: 0.0.40
codegen_flags: <defaults>
</compile_context>

<pallas_src>
import functools

import jax
import jax.numpy as jnp
from jax.experimental import pallas as pl
from jax.experimental.pallas import tpu as pltpu


# ----------------------------- kernel ----------------------------------------

_SQRT_2_OVER_PI = 0.7978845608028654


def _gelu_tanh(x):
    # tanh-approximate GELU; tanh rides the EUP slot (free next to MXU work).
    return 0.5 * x * (1.0 + jnp.tanh(_SQRT_2_OVER_PI * (x + 0.044715 * x * x * x)))


def cnn_stack_kernel(*refs, num_layers, kernel_sizes):
    """Fused Conv1d('same') + folded-BN + GELU stack, channels-last, im2col matmuls.

    refs = (x_ref, w0, b0, w1, b1, ..., o_ref)
      x_ref : (nb, L, C_in)           bf16
      w_i   : (K_i*Cin_i, Cout_i)     BN-folded, bf16, row index = tap*Cin + cin
      b_i   : (1, Cout_i)             BN-folded bias, f32
      o_ref : (nb, L, C_out)          f32
    """
    x_ref = refs[0]
    wb_refs = refs[1:1 + 2 * num_layers]
    o_ref = refs[1 + 2 * num_layers]

    nb, seq_len = x_ref.shape[0], x_ref.shape[1]

    a = x_ref[...].astype(jnp.float32)                       # (nb, L, C_in)
    for i in range(num_layers):                              # static unroll: layers
        k = kernel_sizes[i]
        pad = (k - 1) // 2
        w_ref, b_ref = wb_refs[2 * i], wb_refs[2 * i + 1]
        cin = a.shape[-1]
        cout = w_ref.shape[-1]

        # In-register 'same' zero padding along the sequence (sublane) axis.
        if pad > 0:
            z = jnp.zeros((nb, pad, cin), jnp.float32)
            a_pad = jnp.concatenate([z, a, z], axis=1)       # (nb, L + 2*pad, cin)
        else:
            a_pad = a

        # im2col: K shifted views concatenated along lanes -> single MXU matmul.
        cols = [a_pad[:, t:t + seq_len, :] for t in range(k)]   # each (nb, L, cin)
        lhs = jnp.concatenate(cols, axis=-1).reshape(nb * seq_len, k * cin)

        acc = jnp.dot(lhs.astype(jnp.bfloat16), w_ref[...],
                      preferred_element_type=jnp.float32)    # (nb*L, cout), f32 acc
        acc = acc + b_ref[...]                               # folded BN bias (1, cout)
        a = _gelu_tanh(acc).reshape(nb, seq_len, cout)       # f32 activation
        # Dropout(0.1): identity at inference.

    o_ref[...] = a.astype(o_ref.dtype)                       # single lane-dense store


# ----------------------------- wrapper ----------------------------------------


def _fold_bn_into_conv(p, eps=1e-5):
    """Fold eval-mode BatchNorm1d into the conv; emit im2col (K*Cin, Cout) bf16 weight."""
    scale = p["gamma"] * jax.lax.rsqrt(p["var"] + eps)           # (Cout,)
    w = p["w"] * scale[:, None, None]                            # (Cout, Cin, K)
    b = (p["b"] - p["mean"]) * scale + p["beta"]                 # (Cout,)
    cout, cin, k = w.shape
    # Row index of the im2col matrix is tap*Cin + cin_channel.
    w_mat = jnp.transpose(w, (2, 1, 0)).reshape(k * cin, cout)   # (K*Cin, Cout)
    return w_mat.astype(jnp.bfloat16), b.reshape(1, cout).astype(jnp.float32)


def _block_vmem_bytes(nb, L, c_in, kernel_sizes, out_channels):
    """Rough per-grid-step VMEM footprint: double-buffered I/O + live intermediates."""
    total = 2 * nb * L * c_in * 2                      # bf16 input, double-buffered
    cin = c_in
    peak = 0
    for k, cout in zip(kernel_sizes, out_channels):
        lhs = nb * L * k * cin * 4                     # f32 im2col
        act = nb * L * cout * 4                        # f32 activation
        peak = max(peak, lhs + lhs // 2 + act)         # + bf16 copy of lhs
        total += k * cin * cout * 2 + cout * 4         # weights (bf16) + bias (f32)
        cin = cout
    total += 2 * nb * L * cin * 4                      # f32 output, double-buffered
    return total + peak


def _default_batch_block(N, L, c_in, kernel_sizes, out_channels, budget=20 * 2**20):
    """Largest batch block that (a) leaves >=2 grid steps (v7x megacore) when N >= 2
    and (b) keeps the per-step VMEM footprint under `budget` (v7x: 64 MiB physical)."""
    divisors = sorted((d for d in range(1, N + 1) if N % d == 0), reverse=True)
    for nb in divisors:
        if (N == 1 or N // nb >= 2) and \
           _block_vmem_bytes(nb, L, c_in, kernel_sizes, out_channels) <= budget:
            return nb
    return 1


def cnn_feature_extractor_forward(x, layer_params, *, kernel_sizes,
                                  eps=1e-5, batch_block=None):
    """x: (N, L, C_in) -> (N, L, C_out).  Equals CNNFeatureExtractor.forward (eval).
    (PyTorch transposes to NCL internally; we stay NLC = channels on lanes.)"""
    N, L, c_in = x.shape
    num_layers = len(kernel_sizes)
    out_channels = [p["w"].shape[0] for p in layer_params]
    c_out = out_channels[-1]

    if batch_block is None:
        batch_block = _default_batch_block(N, L, c_in, kernel_sizes, out_channels)
    nb = batch_block
    assert N % nb == 0, "batch_block must divide the batch"

    flat_inputs = [x.astype(jnp.bfloat16)]
    in_specs = [pl.BlockSpec((nb, L, c_in), lambda i: (i, 0, 0))]
    for p, k in zip(layer_params, kernel_sizes):
        assert k % 2 == 1, "padding='same' with even kernel sizes not supported"
        w_mat, b_fold = _fold_bn_into_conv(p, eps)
        flat_inputs += [w_mat, b_fold]
        in_specs += [
            pl.BlockSpec(w_mat.shape, lambda i: (0, 0)),
            pl.BlockSpec(b_fold.shape, lambda i: (0, 0)),
        ]

    # Cost estimate: one (nb*L, K*Cin) @ (K*Cin, Cout) matmul + GELU per layer.
    flops, trans = 0, 0
    bytes_acc = N * L * c_in * 2 + N * L * c_out * 4
    cin = c_in
    for k, cout in zip(kernel_sizes, out_channels):
        flops += 2 * N * L * k * cin * cout
        trans += N * L * cout
        bytes_acc += k * cin * cout * 2 + cout * 4
        cin = cout

    vmem_limit = int(min(max(4 * _block_vmem_bytes(nb, L, c_in, kernel_sizes,
                                                   out_channels),
                             32 * 2**20),
                         56 * 2**20))

    kernel = functools.partial(
        cnn_stack_kernel, num_layers=num_layers, kernel_sizes=tuple(kernel_sizes))

    return pl.pallas_call(
        kernel,
        out_shape=jax.ShapeDtypeStruct((N, L, c_out), jnp.float32),
        grid=(N // nb,),
        in_specs=in_specs,
        out_specs=pl.BlockSpec((nb, L, c_out), lambda i: (i, 0, 0)),
        compiler_params=pltpu.CompilerParams(
            dimension_semantics=("parallel",),
            vmem_limit_bytes=vmem_limit),
        cost_estimate=pl.CostEstimate(flops=flops, transcendentals=trans,
                                      bytes_accessed=bytes_acc),
    )(*flat_inputs)


# ----------------------------- reference (pure JAX) ----------------------------


def _ref_forward(x, layer_params, kernel_sizes, eps=1e-5):
    y = jnp.transpose(x, (0, 2, 1))                     # x.transpose(1, 2) -> (N, C, L)
    for p, k in zip(layer_params, kernel_sizes):
        pad = (k - 1) // 2
        y = jax.lax.conv_general_dilated(
            y, p["w"], window_strides=(1,), padding=[(pad, pad)],
            dimension_numbers=("NCH", "OIH", "NCH"),
            precision=jax.lax.Precision.HIGHEST)
        y = y + p["b"][None, :, None]
        scale = p["gamma"] / jnp.sqrt(p["var"] + eps)   # BatchNorm1d, eval
        y = (y - p["mean"][None, :, None]) * scale[None, :, None] + p["beta"][None, :, None]
        y = _gelu_tanh(y)                               # Dropout: identity in eval
    return jnp.transpose(y, (0, 2, 1))                  # back to (N, L, C_out)


# ----------------------------- main --------------------------------------------


if __name__ == "__main__":
    N, L, C_IN = 2, 16, 4                 # batch, seq length, in_channels
    base_filters = 32
    kernel_sizes = [5, 3, 3]              # -> channels 32, 64, 128

    key = jax.random.PRNGKey(0)
    keys = jax.random.split(key, len(kernel_sizes) + 1)

    layer_params = []
    cin = C_IN
    for i, k in enumerate(kernel_sizes):
        cout = base_filters * (2 ** i)
        lk = jax.random.split(keys[i], 6)
        layer_params.append({
            "w": (0.2 * jax.random.normal(lk[0], (cout, cin, k))).astype(jnp.float32),
            "b": (0.1 * jax.random.normal(lk[1], (cout,))).astype(jnp.float32),
            "gamma": (1.0 + 0.05 * jax.random.normal(lk[2], (cout,))).astype(jnp.float32),
            "beta": (0.05 * jax.random.normal(lk[3], (cout,))).astype(jnp.float32),
            "mean": (0.1 * jax.random.normal(lk[4], (cout,))).astype(jnp.float32),
            "var": jnp.abs(1.0 + 0.1 * jax.random.normal(lk[5], (cout,))).astype(jnp.float32),
        })
        cin = cout

    x = jax.random.normal(keys[-1], (N, L, C_IN), dtype=jnp.float32)

    out = cnn_feature_extractor_forward(x, layer_params, kernel_sizes=kernel_sizes)
    out = jax.block_until_ready(out)

    ref = _ref_forward(x, layer_params, kernel_sizes)
    assert out.shape == (N, L, base_filters * 2 ** (len(kernel_sizes) - 1))
    # bf16 MXU operands (f32 accumulate) vs. f32 reference -> bf16-appropriate tolerance.
    assert jnp.allclose(out, ref, rtol=5e-2, atol=5e-2), "mismatch vs JAX reference"

    print("KERNEL_OK")
</pallas_src>

<mosaic_0001>
module attributes {stable_mosaic.version = 11 : i64} {
  func.func @cnn_stack_kernel(%arg0: i32, %arg1: memref<1x16x4xbf16, #tpu.memory_space<vmem>>, %arg2: memref<20x32xbf16, #tpu.memory_space<vmem>>, %arg3: memref<1x32xf32, #tpu.memory_space<vmem>>, %arg4: memref<96x64xbf16, #tpu.memory_space<vmem>>, %arg5: memref<1x64xf32, #tpu.memory_space<vmem>>, %arg6: memref<192x128xbf16, #tpu.memory_space<vmem>>, %arg7: memref<1x128xf32, #tpu.memory_space<vmem>>, %arg8: memref<1x16x128xf32, #tpu.memory_space<vmem>>) attributes {dimension_semantics = [#tpu.dimension_semantics<parallel>], iteration_bounds = array<i64: 2>, scalar_prefetch = 0 : i64, scratch_operands = 0 : i64, tpu.core_type = #tpu.core_type<tc>, window_params = [{transform_indices = @transform_0, window_bounds = array<i64: 1, 16, 4>}, {pipeline_mode = #tpu.pipeline_mode<synchronous>, transform_indices = @transform_1, window_bounds = array<i64: 20, 32>}, {pipeline_mode = #tpu.pipeline_mode<synchronous>, transform_indices = @transform_2, window_bounds = array<i64: 1, 32>}, {pipeline_mode = #tpu.pipeline_mode<synchronous>, transform_indices = @transform_3, window_bounds = array<i64: 96, 64>}, {pipeline_mode = #tpu.pipeline_mode<synchronous>, transform_indices = @transform_4, window_bounds = array<i64: 1, 64>}, {pipeline_mode = #tpu.pipeline_mode<synchronous>, transform_indices = @transform_5, window_bounds = array<i64: 192, 128>}, {pipeline_mode = #tpu.pipeline_mode<synchronous>, transform_indices = @transform_6, window_bounds = array<i64: 1, 128>}, {transform_indices = @transform_7, window_bounds = array<i64: 1, 16, 128>}]} {
    %c0 = arith.constant 0 : index
    %c0_0 = arith.constant 0 : index
    %c0_1 = arith.constant 0 : index
    %0 = vector.load %arg1[%c0, %c0_0, %c0_1] : memref<1x16x4xbf16, #tpu.memory_space<vmem>>, vector<1x16x4xbf16>
    %1 = arith.extf %0 : vector<1x16x4xbf16> to vector<1x16x4xf32>
    %cst = arith.constant 0.000000e+00 : f32
    %2 = vector.broadcast %cst : f32 to vector<1x2x4xf32>
    %3 = tpu.concatenate %2, %1, %2 in 1 : vector<1x2x4xf32>, vector<1x16x4xf32>, vector<1x2x4xf32> -> vector<1x20x4xf32>
    %4 = vector.extract_strided_slice %3 {offsets = [0, 0, 0], sizes = [1, 16, 4], strides = [1, 1, 1]} : vector<1x20x4xf32> to vector<1x16x4xf32>
    %5 = vector.extract_strided_slice %3 {offsets = [0, 1, 0], sizes = [1, 16, 4], strides = [1, 1, 1]} : vector<1x20x4xf32> to vector<1x16x4xf32>
    %6 = vector.extract_strided_slice %3 {offsets = [0, 2, 0], sizes = [1, 16, 4], strides = [1, 1, 1]} : vector<1x20x4xf32> to vector<1x16x4xf32>
    %7 = vector.extract_strided_slice %3 {offsets = [0, 3, 0], sizes = [1, 16, 4], strides = [1, 1, 1]} : vector<1x20x4xf32> to vector<1x16x4xf32>
    %8 = vector.extract_strided_slice %3 {offsets = [0, 4, 0], sizes = [1, 16, 4], strides = [1, 1, 1]} : vector<1x20x4xf32> to vector<1x16x4xf32>
    %9 = tpu.concatenate %4, %5, %6, %7, %8 in 2 : vector<1x16x4xf32>, vector<1x16x4xf32>, vector<1x16x4xf32>, vector<1x16x4xf32>, vector<1x16x4xf32> -> vector<1x16x20xf32>
    %10 = vector.shape_cast %9 : vector<1x16x20xf32> to vector<16x20xf32>
    %11 = arith.truncf %10 : vector<16x20xf32> to vector<16x20xbf16>
    %c0_2 = arith.constant 0 : index
    %c0_3 = arith.constant 0 : index
    %12 = vector.load %arg2[%c0_2, %c0_3] : memref<20x32xbf16, #tpu.memory_space<vmem>>, vector<20x32xbf16>
    %cst_4 = arith.constant dense<0.000000e+00> : vector<16x32xf32>
    %13 = tpu.matmul %11, %12, %cst_4 {dimension_numbers = #tpu.dot_dimension_numbers<[1], [0], [0], [1], [0, 0, 1, 1], [], []>} : vector<16x20xbf16>, vector<20x32xbf16>, vector<16x32xf32> -> vector<16x32xf32>
    %c0_5 = arith.constant 0 : index
    %c0_6 = arith.constant 0 : index
    %14 = vector.load %arg3[%c0_5, %c0_6] : memref<1x32xf32, #tpu.memory_space<vmem>>, vector<1x32xf32>
    %15 = vector.broadcast %14 : vector<1x32xf32> to vector<16x32xf32>
    %16 = arith.addf %13, %15 : vector<16x32xf32>
    %cst_7 = arith.constant 5.000000e-01 : f32
    %17 = vector.broadcast %cst_7 : f32 to vector<16x32xf32>
    %18 = arith.mulf %17, %16 : vector<16x32xf32>
    %cst_8 = arith.constant 4.471500e-02 : f32
    %19 = vector.broadcast %cst_8 : f32 to vector<16x32xf32>
    %20 = arith.mulf %19, %16 : vector<16x32xf32>
    %21 = arith.mulf %20, %16 : vector<16x32xf32>
    %22 = arith.mulf %21, %16 : vector<16x32xf32>
    %23 = arith.addf %16, %22 : vector<16x32xf32>
    %cst_9 = arith.constant 0.797884583 : f32
    %24 = vector.broadcast %cst_9 : f32 to vector<16x32xf32>
    %25 = arith.mulf %24, %23 : vector<16x32xf32>
    %26 = math.tanh %25 : vector<16x32xf32>
    %cst_10 = arith.constant 1.000000e+00 : f32
    %27 = vector.broadcast %cst_10 : f32 to vector<16x32xf32>
    %28 = arith.addf %27, %26 : vector<16x32xf32>
    %29 = arith.mulf %18, %28 : vector<16x32xf32>
    %30 = vector.shape_cast %29 : vector<16x32xf32> to vector<1x16x32xf32>
    %cst_11 = arith.constant 0.000000e+00 : f32
    %31 = vector.broadcast %cst_11 : f32 to vector<1x1x32xf32>
    %32 = tpu.concatenate %31, %30, %31 in 1 : vector<1x1x32xf32>, vector<1x16x32xf32>, vector<1x1x32xf32> -> vector<1x18x32xf32>
    %33 = vector.extract_strided_slice %32 {offsets = [0, 0, 0], sizes = [1, 16, 32], strides = [1, 1, 1]} : vector<1x18x32xf32> to vector<1x16x32xf32>
    %34 = vector.extract_strided_slice %32 {offsets = [0, 1, 0], sizes = [1, 16, 32], strides = [1, 1, 1]} : vector<1x18x32xf32> to vector<1x16x32xf32>
    %35 = vector.extract_strided_slice %32 {offsets = [0, 2, 0], sizes = [1, 16, 32], strides = [1, 1, 1]} : vector<1x18x32xf32> to vector<1x16x32xf32>
    %36 = tpu.concatenate %33, %34, %35 in 2 : vector<1x16x32xf32>, vector<1x16x32xf32>, vector<1x16x32xf32> -> vector<1x16x96xf32>
    %37 = vector.shape_cast %36 : vector<1x16x96xf32> to vector<16x96xf32>
    %38 = arith.truncf %37 : vector<16x96xf32> to vector<16x96xbf16>
    %c0_12 = arith.constant 0 : index
    %c0_13 = arith.constant 0 : index
    %39 = vector.load %arg4[%c0_12, %c0_13] : memref<96x64xbf16, #tpu.memory_space<vmem>>, vector<96x64xbf16>
    %cst_14 = arith.constant dense<0.000000e+00> : vector<16x64xf32>
    %40 = tpu.matmul %38, %39, %cst_14 {dimension_numbers = #tpu.dot_dimension_numbers<[1], [0], [0], [1], [0, 0, 1, 1], [], []>} : vector<16x96xbf16>, vector<96x64xbf16>, vector<16x64xf32> -> vector<16x64xf32>
    %c0_15 = arith.constant 0 : index
    %c0_16 = arith.constant 0 : index
    %41 = vector.load %arg5[%c0_15, %c0_16] : memref<1x64xf32, #tpu.memory_space<vmem>>, vector<1x64xf32>
    %42 = vector.broadcast %41 : vector<1x64xf32> to vector<16x64xf32>
    %43 = arith.addf %40, %42 : vector<16x64xf32>
    %cst_17 = arith.constant 5.000000e-01 : f32
    %44 = vector.broadcast %cst_17 : f32 to vector<16x64xf32>
    %45 = arith.mulf %44, %43 : vector<16x64xf32>
    %cst_18 = arith.constant 4.471500e-02 : f32
    %46 = vector.broadcast %cst_18 : f32 to vector<16x64xf32>
    %47 = arith.mulf %46, %43 : vector<16x64xf32>
    %48 = arith.mulf %47, %43 : vector<16x64xf32>
    %49 = arith.mulf %48, %43 : vector<16x64xf32>
    %50 = arith.addf %43, %49 : vector<16x64xf32>
    %cst_19 = arith.constant 0.797884583 : f32
    %51 = vector.broadcast %cst_19 : f32 to vector<16x64xf32>
    %52 = arith.mulf %51, %50 : vector<16x64xf32>
    %53 = math.tanh %52 : vector<16x64xf32>
    %cst_20 = arith.constant 1.000000e+00 : f32
    %54 = vector.broadcast %cst_20 : f32 to vector<16x64xf32>
    %55 = arith.addf %54, %53 : vector<16x64xf32>
    %56 = arith.mulf %45, %55 : vector<16x64xf32>
    %57 = vector.shape_cast %56 : vector<16x64xf32> to vector<1x16x64xf32>
    %cst_21 = arith.constant 0.000000e+00 : f32
    %58 = vector.broadcast %cst_21 : f32 to vector<1x1x64xf32>
    %59 = tpu.concatenate %58, %57, %58 in 1 : vector<1x1x64xf32>, vector<1x16x64xf32>, vector<1x1x64xf32> -> vector<1x18x64xf32>
    %60 = vector.extract_strided_slice %59 {offsets = [0, 0, 0], sizes = [1, 16, 64], strides = [1, 1, 1]} : vector<1x18x64xf32> to vector<1x16x64xf32>
    %61 = vector.extract_strided_slice %59 {offsets = [0, 1, 0], sizes = [1, 16, 64], strides = [1, 1, 1]} : vector<1x18x64xf32> to vector<1x16x64xf32>
    %62 = vector.extract_strided_slice %59 {offsets = [0, 2, 0], sizes = [1, 16, 64], strides = [1, 1, 1]} : vector<1x18x64xf32> to vector<1x16x64xf32>
    %63 = tpu.concatenate %60, %61, %62 in 2 : vector<1x16x64xf32>, vector<1x16x64xf32>, vector<1x16x64xf32> -> vector<1x16x192xf32>
    %64 = vector.shape_cast %63 : vector<1x16x192xf32> to vector<16x192xf32>
    %65 = arith.truncf %64 : vector<16x192xf32> to vector<16x192xbf16>
    %c0_22 = arith.constant 0 : index
    %c0_23 = arith.constant 0 : index
    %66 = vector.load %arg6[%c0_22, %c0_23] : memref<192x128xbf16, #tpu.memory_space<vmem>>, vector<192x128xbf16>
    %cst_24 = arith.constant dense<0.000000e+00> : vector<16x128xf32>
    %67 = tpu.matmul %65, %66, %cst_24 {dimension_numbers = #tpu.dot_dimension_numbers<[1], [0], [0], [1], [0, 0, 1, 1], [], []>} : vector<16x192xbf16>, vector<192x128xbf16>, vector<16x128xf32> -> vector<16x128xf32>
    %c0_25 = arith.constant 0 : index
    %c0_26 = arith.constant 0 : index
    %68 = vector.load %arg7[%c0_25, %c0_26] : memref<1x128xf32, #tpu.memory_space<vmem>>, vector<1x128xf32>
    %69 = vector.broadcast %68 : vector<1x128xf32> to vector<16x128xf32>
    %70 = arith.addf %67, %69 : vector<16x128xf32>
    %cst_27 = arith.constant 5.000000e-01 : f32
    %71 = vector.broadcast %cst_27 : f32 to vector<16x128xf32>
    %72 = arith.mulf %71, %70 : vector<16x128xf32>
    %cst_28 = arith.constant 4.471500e-02 : f32
    %73 = vector.broadcast %cst_28 : f32 to vector<16x128xf32>
    %74 = arith.mulf %73, %70 : vector<16x128xf32>
    %75 = arith.mulf %74, %70 : vector<16x128xf32>
    %76 = arith.mulf %75, %70 : vector<16x128xf32>
    %77 = arith.addf %70, %76 : vector<16x128xf32>
    %cst_29 = arith.constant 0.797884583 : f32
    %78 = vector.broadcast %cst_29 : f32 to vector<16x128xf32>
    %79 = arith.mulf %78, %77 : vector<16x128xf32>
    %80 = math.tanh %79 : vector<16x128xf32>
    %cst_30 = arith.constant 1.000000e+00 : f32
    %81 = vector.broadcast %cst_30 : f32 to vector<16x128xf32>
    %82 = arith.addf %81, %80 : vector<16x128xf32>
    %83 = arith.mulf %72, %82 : vector<16x128xf32>
    %84 = vector.shape_cast %83 : vector<16x128xf32> to vector<1x16x128xf32>
    %c0_31 = arith.constant 0 : index
    %c0_32 = arith.constant 0 : index
    %c0_33 = arith.constant 0 : index
    %85 = vector.load %arg8[%c0_31, %c0_32, %c0_33] : memref<1x16x128xf32, #tpu.memory_space<vmem>>, vector<1x16x128xf32>
    tpu.vector_store %arg8[%c0_31, %c0_32, %c0_33], %84 {strides = array<i32>} : memref<1x16x128xf32, #tpu.memory_space<vmem>>, vector<1x16x128xf32>,
    return
  }
  func.func @transform_0(%arg0: i32) -> (i32, i32, i32) {
    %c0_i32 = arith.constant 0 : i32
    %c0_i32_0 = arith.constant 0 : i32
    %c0_i32_1 = arith.constant 0 : i32
    return %arg0, %c0_i32, %c0_i32_0 : i32, i32, i32
  }
  func.func @transform_1(%arg0: i32) -> (i32, i32) {
    %c0_i32 = arith.constant 0 : i32
    %c0_i32_0 = arith.constant 0 : i32
    %c0_i32_1 = arith.constant 0 : i32
    return %c0_i32, %c0_i32_0 : i32, i32
  }
  func.func @transform_2(%arg0: i32) -> (i32, i32) {
    %c0_i32 = arith.constant 0 : i32
    %c0_i32_0 = arith.constant 0 : i32
    %c0_i32_1 = arith.constant 0 : i32
    return %c0_i32, %c0_i32_0 : i32, i32
  }
  func.func @transform_3(%arg0: i32) -> (i32, i32) {
    %c0_i32 = arith.constant 0 : i32
    %c0_i32_0 = arith.constant 0 : i32
    %c0_i32_1 = arith.constant 0 : i32
    return %c0_i32, %c0_i32_0 : i32, i32
  }
  func.func @transform_4(%arg0: i32) -> (i32, i32) {
    %c0_i32 = arith.constant 0 : i32
    %c0_i32_0 = arith.constant 0 : i32
    %c0_i32_1 = arith.constant 0 : i32
    return %c0_i32, %c0_i32_0 : i32, i32
  }
  func.func @transform_5(%arg0: i32) -> (i32, i32) {
    %c0_i32 = arith.constant 0 : i32
    %c0_i32_0 = arith.constant 0 : i32
    %c0_i32_1 = arith.constant 0 : i32
    return %c0_i32, %c0_i32_0 : i32, i32
  }
  func.func @transform_6(%arg0: i32) -> (i32, i32) {
    %c0_i32 = arith.constant 0 : i32
    %c0_i32_0 = arith.constant 0 : i32
    %c0_i32_1 = arith.constant 0 : i32
    return %c0_i32, %c0_i32_0 : i32, i32
  }
  func.func @transform_7(%arg0: i32) -> (i32, i32, i32) {
    %c0_i32 = arith.constant 0 : i32
    %c0_i32_0 = arith.constant 0 : i32
    %c0_i32_1 = arith.constant 0 : i32
    return %arg0, %c0_i32, %c0_i32_0 : i32, i32, i32
  }
}

</mosaic_0001>

<llo_original>
// kernel: tpu_custom_call.1
$region0: #{tpu_custom_call.1}
  #allocation0 [shape = 'u32[]', space=smem, size = 0x4, offset = 0x4, fixed_abs, tag = 'smem constant byte address 0x4 - core index']
  #allocation1 [shape = 'u32[144,128]{1,0:T(1,128)}', space=vmem, size = 0x12000, scoped, tag = 'internal scratch']
  %s0 = inlined_call_operand.vmem [shape: bf16[2,16,4], index: 0, kind: input, shape index: {}]
  %s1 = inlined_call_operand.vmem [shape: bf16[20,32], index: 1, kind: input, shape index: {}]
  %s2 = inlined_call_operand.vmem [shape: f32[1,32], index: 2, kind: input, shape index: {}]
  %s3 = inlined_call_operand.vmem [shape: bf16[96,64], index: 3, kind: input, shape index: {}]
  %s4 = inlined_call_operand.hbm [shape: f32[1,64], index: 4, kind: input, shape index: {}]
  %s5 = inlined_call_operand.vmem [shape: bf16[192,128], index: 5, kind: input, shape index: {}]
  %s6 = inlined_call_operand.vmem [shape: f32[1,128], index: 6, kind: input, shape index: {}]
  %s7 = inlined_call_operand.hbm [shape: f32[2,16,128], index: 7, kind: output, shape index: {}]
  %s8 = sld [smem:[#allocation0]]
  $region65: #{tpu_custom_call.1} parent=0
    _
  %s10 = ssub.s32 1, %s8
  %s11 = scalar_select 0, %s10, %s8
  $region1: #{tpu_custom_call.1} parent=0
    #allocation2 [shape = 'u8[512]{0}', space=vmem, size = 0x400, scoped, tag = 'input window, operand 4, single buffered']
    #allocation3 [shape = 's32[2]{0}', space=sflag, size = 0x8, scoped, tag = 'scoped memory for tpu_custom_call.1']
    #allocation4 [shape = 's32[2]{0}', space=sflag, size = 0x8, scoped, tag = 'scoped memory for tpu_custom_call.1']
    #allocation5 [shape = 'u8[16384]{0}', space=vmem, size = 0x4000, scoped, tag = 'output window, operand 0']
    %12 = vsyncpa [#allocation3], 0
    %13 = vsyncpa [#allocation4], 0
    %s14 = scalar_lea.sflag [#allocation4], 1
    %15 = vsyncpa %s14, 0
    loop: start=0, step=1, limit=4
    $region2: #{tpu_custom_call.1} parent=1 // loop_pre_header
      _
    $region3: #{tpu_custom_call.1} parent=1 // loop_header
      %s17 = sphi 0, %s21
      %p18 = scmp.ge.s32.totalorder %s17, 4
      %s27 = sphi 0, %s29
      %s30 = sphi 0, %s27
      %s31 = sphi 0, %s30
      %s47 = sphi 0, %s31
      %s51 = sphi 0, %s51
      %s53 = sphi 0, %s51
      %s54 = sphi 0, %s53
      %s68 = sphi 0, %s54
      %s72 = sphi 0, %s72
      %s74 = sphi 0, %s72
      %s75 = sphi 0, %s74
      %s89 = sphi 0, %s75
      %s93 = sphi 0, %s93
      %s95 = sphi 0, %s93
      %s96 = sphi 0, %s95
      %s110 = sphi 0, %s96
      %s114 = sphi 0, %s114
      %s116 = sphi 0, %s114
      %s117 = sphi 0, %s116
      %s131 = sphi 0, %s117
      %s135 = sphi 0, %s135
      %s137 = sphi 0, %s135
      %s138 = sphi 0, %s137
      %s152 = sphi 0, %s138
      %s156 = sphi 0, %s156
      %s158 = sphi 0, %s156
      %s159 = sphi 0, %s158
      %s173 = sphi 0, %s159
      %s179 = sphi 0, %s181
      %s182 = sphi 0, %s179
      %s183 = sphi 0, %s182
      %s199 = sphi 0, %s183
    $region4: #{tpu_custom_call.1} parent=1 // loop_header_branch
      %20 = sbr.rel (%p18) target = $region8
    $region5: #{tpu_custom_call.1} parent=1 // loop_body
      %s22 = ssub.s32 %s17, 1
      %s23 = ssub.s32 %s17, 2
      %s24 = sadd.s32 %s17, 1
      %s25 = ssub.s32 %s17, %s24
      %p26 = scmp.eq.s32.totalorder %s25, 0
      %s28 = sadd.s32 %s27, 1
      %s29 = scalar_select %p26, %s27, %s28
      %p32 = pneg %p26
      %p33 = scmp.eq.s32.totalorder %s17, 1
      %p34 = por %p32, %p33
      %p35 = scmp.ne.s32.totalorder %s27, %s30
      %p36 = scmp.eq.s32.totalorder %s17, 0
      %p37 = por %p35, %p36
      %p38 = scmp.ne.s32.totalorder %s27, %s30
      %p39 = scmp.eq.s32.totalorder %s22, 1
      %p40 = por %p38, %p39
      %p41 = scmp.ne.s32.totalorder %s30, %s31
      %p42 = scmp.eq.s32.totalorder %s22, 0
      %p43 = por %p41, %p42
      %p44 = scmp.ne.s32.totalorder %s30, %s31
      %p45 = scmp.eq.s32.totalorder %s23, 1
      %p46 = por %p44, %p45
      %p48 = scmp.ne.s32.totalorder %s31, %s47
      %p49 = scmp.eq.s32.totalorder %s23, 0
      %p50 = por %p48, %p49
      %s52 = sadd.s32 %s51, 1
      %p55 = scmp.eq.s32.totalorder %s17, 1
      %p56 = scmp.ne.s32.totalorder %s51, %s53
      %p57 = scmp.eq.s32.totalorder %s17, 0
      %p58 = por %p56, %p57
      %p59 = scmp.ne.s32.totalorder %s51, %s53
      %p60 = scmp.eq.s32.totalorder %s22, 1
      %p61 = por %p59, %p60
      %p62 = scmp.ne.s32.totalorder %s53, %s54
      %p63 = scmp.eq.s32.totalorder %s22, 0
      %p64 = por %p62, %p63
      %p65 = scmp.ne.s32.totalorder %s53, %s54
      %p66 = scmp.eq.s32.totalorder %s23, 1
      %p67 = por %p65, %p66
      %p69 = scmp.ne.s32.totalorder %s54, %s68
      %p70 = scmp.eq.s32.totalorder %s23, 0
      %p71 = por %p69, %p70
      %s73 = sadd.s32 %s72, 1
      %p76 = scmp.eq.s32.totalorder %s17, 1
      %p77 = scmp.ne.s32.totalorder %s72, %s74
      %p78 = scmp.eq.s32.totalorder %s17, 0
      %p79 = por %p77, %p78
      %p80 = scmp.ne.s32.totalorder %s72, %s74
      %p81 = scmp.eq.s32.totalorder %s22, 1
      %p82 = por %p80, %p81
      %p83 = scmp.ne.s32.totalorder %s74, %s75
      %p84 = scmp.eq.s32.totalorder %s22, 0
      %p85 = por %p83, %p84
      %p86 = scmp.ne.s32.totalorder %s74, %s75
      %p87 = scmp.eq.s32.totalorder %s23, 1
      %p88 = por %p86, %p87
      %p90 = scmp.ne.s32.totalorder %s75, %s89
      %p91 = scmp.eq.s32.totalorder %s23, 0
      %p92 = por %p90, %p91
      %s94 = sadd.s32 %s93, 1
      %p97 = scmp.eq.s32.totalorder %s17, 1
      %p98 = scmp.ne.s32.totalorder %s93, %s95
      %p99 = scmp.eq.s32.totalorder %s17, 0
      %p100 = por %p98, %p99
      %p101 = scmp.ne.s32.totalorder %s93, %s95
      %p102 = scmp.eq.s32.totalorder %s22, 1
      %p103 = por %p101, %p102
      %p104 = scmp.ne.s32.totalorder %s95, %s96
      %p105 = scmp.eq.s32.totalorder %s22, 0
      %p106 = por %p104, %p105
      %p107 = scmp.ne.s32.totalorder %s95, %s96
      %p108 = scmp.eq.s32.totalorder %s23, 1
      %p109 = por %p107, %p108
      %p111 = scmp.ne.s32.totalorder %s96, %s110
      %p112 = scmp.eq.s32.totalorder %s23, 0
      %p113 = por %p111, %p112
      %s115 = sadd.s32 %s114, 1
      %p118 = scmp.eq.s32.totalorder %s17, 1
      %p119 = scmp.ne.s32.totalorder %s114, %s116
      %p120 = scmp.eq.s32.totalorder %s17, 0
      %p121 = por %p119, %p120
      %p122 = scmp.ne.s32.totalorder %s114, %s116
      %p123 = scmp.eq.s32.totalorder %s22, 1
      %p124 = por %p122, %p123
      %p125 = scmp.ne.s32.totalorder %s116, %s117
      %p126 = scmp.eq.s32.totalorder %s22, 0
      %p127 = por %p125, %p126
      %p128 = scmp.ne.s32.totalorder %s116, %s117
      %p129 = scmp.eq.s32.totalorder %s23, 1
      %p130 = por %p128, %p129
      %p132 = scmp.ne.s32.totalorder %s117, %s131
      %p133 = scmp.eq.s32.totalorder %s23, 0
      %p134 = por %p132, %p133
      %s136 = sadd.s32 %s135, 1
      %p139 = scmp.eq.s32.totalorder %s17, 1
      %p140 = scmp.ne.s32.totalorder %s135, %s137
      %p141 = scmp.eq.s32.totalorder %s17, 0
      %p142 = por %p140, %p141
      %p143 = scmp.ne.s32.totalorder %s135, %s137
      %p144 = scmp.eq.s32.totalorder %s22, 1
      %p145 = por %p143, %p144
      %p146 = scmp.ne.s32.totalorder %s137, %s138
      %p147 = scmp.eq.s32.totalorder %s22, 0
      %p148 = por %p146, %p147
      %p149 = scmp.ne.s32.totalorder %s137, %s138
      %p150 = scmp.eq.s32.totalorder %s23, 1
      %p151 = por %p149, %p150
      %p153 = scmp.ne.s32.totalorder %s138, %s152
      %p154 = scmp.eq.s32.totalorder %s23, 0
      %p155 = por %p153, %p154
      %s157 = sadd.s32 %s156, 1
      %p160 = scmp.eq.s32.totalorder %s17, 1
      %p161 = scmp.ne.s32.totalorder %s156, %s158
      %p162 = scmp.eq.s32.totalorder %s17, 0
      %p163 = por %p161, %p162
      %p164 = scmp.ne.s32.totalorder %s156, %s158
      %p165 = scmp.eq.s32.totalorder %s22, 1
      %p166 = por %p164, %p165
      %p167 = scmp.ne.s32.totalorder %s158, %s159
      %p168 = scmp.eq.s32.totalorder %s22, 0
      %p169 = por %p167, %p168
      %p170 = scmp.ne.s32.totalorder %s158, %s159
      %p171 = scmp.eq.s32.totalorder %s23, 1
      %p172 = por %p170, %p171
      %p174 = scmp.ne.s32.totalorder %s159, %s173
      %p175 = scmp.eq.s32.totalorder %s23, 0
      %p176 = por %p174, %p175
      %s177 = ssub.s32 %s17, %s24
      %p178 = scmp.eq.s32.totalorder %s177, 0
      %s180 = sadd.s32 %s179, 1
      %s181 = scalar_select %p178, %s179, %s180
      %p184 = pneg %p178
      %p185 = scmp.eq.s32.totalorder %s17, 1
      %p186 = por %p184, %p185
      %p187 = scmp.ne.s32.totalorder %s179, %s182
      %p188 = scmp.eq.s32.totalorder %s17, 0
      %p189 = por %p187, %p188
      %p190 = scmp.ne.s32.totalorder %s179, %s182
      %p191 = scmp.eq.s32.totalorder %s22, 1
      %p192 = por %p190, %p191
      %p193 = scmp.ne.s32.totalorder %s182, %s183
      %p194 = scmp.eq.s32.totalorder %s22, 0
      %p195 = por %p193, %p194
      %p196 = scmp.ne.s32.totalorder %s182, %s183
      %p197 = scmp.eq.s32.totalorder %s23, 1
      %p198 = por %p196, %p197
      %p200 = scmp.ne.s32.totalorder %s183, %s199
      %p201 = scmp.eq.s32.totalorder %s23, 0
      %p202 = por %p200, %p201
      %p203 = scmp.le.s32.totalorder 1, %s17
      %p204 = scmp.lt.s32.totalorder %s17, 3
      %p205 = pnand %p203, %p204
      %p206 = pneg %p205
      // Predicated region
      $region9: #{tpu_custom_call.1} parent=5 // pred_check
        _
      $region10: #{tpu_custom_call.1} parent=5 // pred_check_branch
        %208 = sbr.rel (%p205) target = $region12
      $region11: #{tpu_custom_call.1} parent=5 // pred_region
        %s209 = ssub.s32 %s17, 1
        // Predicated region
        $region13: #{tpu_custom_call.1} parent=11 // pred_check
          %p210 = pneg %p64
        $region14: #{tpu_custom_call.1} parent=11 // pred_check_branch
          %212 = sbr.rel (%p210) target = $region16
        $region15: #{tpu_custom_call.1} parent=11 // pred_region
          _
        $region16: #{tpu_custom_call.1} parent=11 // pred_fallthru
          _
        // Predicated region
        $region17: #{tpu_custom_call.1} parent=11 // pred_check
          %p213 = pneg %p85
        $region18: #{tpu_custom_call.1} parent=11 // pred_check_branch
          %215 = sbr.rel (%p213) target = $region20
        $region19: #{tpu_custom_call.1} parent=11 // pred_region
          _
        $region20: #{tpu_custom_call.1} parent=11 // pred_fallthru
          _
        // Predicated region
        $region21: #{tpu_custom_call.1} parent=11 // pred_check
          %p216 = pneg %p106
        $region22: #{tpu_custom_call.1} parent=11 // pred_check_branch
          %218 = sbr.rel (%p216) target = $region24
        $region23: #{tpu_custom_call.1} parent=11 // pred_region
          _
        $region24: #{tpu_custom_call.1} parent=11 // pred_fallthru
          _
        // Predicated region
        $region25: #{tpu_custom_call.1} parent=11 // pred_check
          %p219 = pneg %p127
        $region26: #{tpu_custom_call.1} parent=11 // pred_check_branch
          %221 = sbr.rel (%p219) target = $region28
        $region27: #{tpu_custom_call.1} parent=11 // pred_region
          %s223 = ssub.s32 16, 16
          %224 = vsyncadd [#allocation3], %s223
          %s226 = sshll.u32 [#allocation2], 4
          %s227 = int_to_ptr.vmem [resolvable:$true] %s226
          %229 = dma.hbm_to_vmem [thread:$0]  %s4, 16, %s227, [#allocation3]
        $region28: #{tpu_custom_call.1} parent=11 // pred_fallthru
          _
        // Predicated region
        $region29: #{tpu_custom_call.1} parent=11 // pred_check
          %p230 = pneg %p148
        $region30: #{tpu_custom_call.1} parent=11 // pred_check_branch
          %232 = sbr.rel (%p230) target = $region32
        $region31: #{tpu_custom_call.1} parent=11 // pred_region
          _
        $region32: #{tpu_custom_call.1} parent=11 // pred_fallthru
          _
        // Predicated region
        $region33: #{tpu_custom_call.1} parent=11 // pred_check
          %p233 = pneg %p169
        $region34: #{tpu_custom_call.1} parent=11 // pred_check_branch
          %235 = sbr.rel (%p233) target = $region36
        $region35: #{tpu_custom_call.1} parent=11 // pred_region
          _
        $region36: #{tpu_custom_call.1} parent=11 // pred_fallthru
          _
      $region12: #{tpu_custom_call.1} parent=5 // pred_fallthru
        _
      %p236 = scmp.lt.s32.totalorder %s17, 2
      // Predicated region
      $region37: #{tpu_custom_call.1} parent=5 // pred_check
        %p237 = pneg %p236
      $region38: #{tpu_custom_call.1} parent=5 // pred_check_branch
        %239 = sbr.rel (%p237) target = $region40
      $region39: #{tpu_custom_call.1} parent=5 // pred_region
        // Predicated region
        $region41: #{tpu_custom_call.1} parent=39 // pred_check
          %p240 = pneg %p37
        $region42: #{tpu_custom_call.1} parent=39 // pred_check_branch
          %242 = sbr.rel (%p240) target = $region44
        $region43: #{tpu_custom_call.1} parent=39 // pred_region
          %p243 = scmp.lt.s32.totalorder %s17, 1
          %s244 = scalar_select %p243, %s17, 1
          %s245 = smul.addr %s244, 2
          %s246 = smul.addr %s245, 4
          %s247 = scalar_lea.vmem %s0, %s246
        $region44: #{tpu_custom_call.1} parent=39 // pred_fallthru
          _
      $region40: #{tpu_custom_call.1} parent=5 // pred_fallthru
        _
      %p248 = scmp.le.s32.totalorder 1, %s17
      %p249 = scmp.lt.s32.totalorder %s17, 3
      %p250 = pnand %p248, %p249
      %p251 = pneg %p250
      // Predicated region
      $region45: #{tpu_custom_call.1} parent=5 // pred_check
        _
      $region46: #{tpu_custom_call.1} parent=5 // pred_check_branch
        %253 = sbr.rel (%p250) target = $region48
      $region47: #{tpu_custom_call.1} parent=5 // pred_region
        %s254 = ssub.s32 %s17, 1
        // Predicated region
        $region49: #{tpu_custom_call.1} parent=47 // pred_check
          %p255 = pneg %p127
        $region50: #{tpu_custom_call.1} parent=47 // pred_check_branch
          %257 = sbr.rel (%p255) target = $region52
        $region51: #{tpu_custom_call.1} parent=47 // pred_region
          %258 = dma.done [#allocation3], 16
        $region52: #{tpu_custom_call.1} parent=47 // pred_fallthru
          _
        %p259 = scmp.lt.s32.totalorder %s22, 1
        %s260 = scalar_select %p259, %s22, 1
        %s261 = smul.addr %s260, 2
        %s262 = smul.addr %s261, 4
        %s263 = scalar_lea.vmem %s0, %s262
        %p264 = pneg %p43
        %p265 = pneg %p40
        %p266 = pneg %p64
        %p267 = pneg %p61
        %p268 = pneg %p85
        %p269 = pneg %p82
        %p270 = pneg %p106
        %p271 = pneg %p103
        %p272 = pneg %p127
        %p273 = pneg %p124
        %p274 = pneg %p148
        %p275 = pneg %p145
        %p276 = pneg %p169
        %p277 = pneg %p166
        %p278 = pneg %p195
        %p279 = pneg %p192
        %s280 = sand.u32 %s182, 1
        %s281 = scalar_lea.sflag [#allocation4], %s280
        %s282 = sand.u32 %s182, 1
        %s283 = smul.addr %s282, 16
        %s284 = scalar_lea.vmem [#allocation5], %s283
        %p285 = scmp.lt.s32.totalorder %s22, 1
        %s286 = scalar_select %p285, %s22, 1
        %s287 = smul.addr %s286, 2
        %s288 = smul.addr %s287, 4
        %s289 = scalar_lea.vmem %s0, %s288
        %v291 = vld [vmem:[%s289] sm:$0xf]
        %v292 = vld [vmem:[%s289 + $0x4] sm:$0xf]
        %v293 = vunpack.c.l.bf16 %v291
        %v294 = vunpack.c.l.bf16 %v292
        %vm297 = vcmask 1041408
        %v298 = vrot.slane %v293, 6
        %v299 = vrot.slane %v294, 6
        %v300 = vsel %vm297, %v298, %v299
        %v304 = vsel %vm297, 0.0, %v298
        %v305 = vsel %vm297, %v299, 0.0
        %vm308 = vcmask 1046528
        %v309 = vrot.slane %v304, 1
        %v310 = vrot.slane %v300, 1
        %v311 = vsel %vm308, %v309, %v310
        %v312 = vrot.slane %v305, 1
        %v313 = vsel %vm308, %v310, %v312
        %314 = vrot.lane.b32.xlu0 %v311, 4
        %v315 = vpop.permute.xlu0 %314
        %316 = vrot.lane.b32.xlu0 %v313, 4
        %v317 = vpop.permute.xlu0 %316
        %vm320 = vcmask 1045504
        %v321 = vrot.slane %v304, 2
        %v322 = vrot.slane %v300, 2
        %v323 = vsel %vm320, %v321, %v322
        %v324 = vrot.slane %v305, 2
        %v325 = vsel %vm320, %v322, %v324
        %326 = vrot.lane.b32.xlu0 %v323, 8
        %v327 = vpop.permute.xlu0 %326
        %328 = vrot.lane.b32.xlu0 %v325, 8
        %v329 = vpop.permute.xlu0 %328
        %vm332 = vcmask 1044480
        %v333 = vrot.slane %v304, 3
        %v334 = vrot.slane %v300, 3
        %v335 = vsel %vm332, %v333, %v334
        %v336 = vrot.slane %v305, 3
        %v337 = vsel %vm332, %v334, %v336
        %338 = vrot.lane.b32.xlu0 %v335, 12
        %v339 = vpop.permute.xlu0 %338
        %340 = vrot.lane.b32.xlu0 %v337, 12
        %v341 = vpop.permute.xlu0 %340
        %vm344 = vcmask 1043456
        %v345 = vrot.slane %v304, 4
        %v346 = vrot.slane %v300, 4
        %v347 = vsel %vm344, %v345, %v346
        %v348 = vrot.slane %v305, 4
        %v349 = vsel %vm344, %v346, %v348
        %350 = vrot.lane.b32.xlu0 %v347, 16
        %v351 = vpop.permute.xlu0 %350
        %352 = vrot.lane.b32.xlu0 %v349, 16
        %v353 = vpop.permute.xlu0 %352
        %vm356 = vcmask 31744
        %v357 = vsel %vm356, %v304, %v315
        %v358 = vsel %vm356, %v300, %v317
        %vm359 = vcmask 64512
        %v360 = vsel %vm359, %v357, %v327
        %v361 = vsel %vm359, %v358, %v329
        %vm362 = vcmask 97280
        %v363 = vsel %vm362, %v360, %v339
        %v364 = vsel %vm362, %v361, %v341
        %vm365 = vcmask 130048
        %v366 = vsel %vm365, %v363, %v351
        %v367 = vsel %vm365, %v364, %v353
        %v368 = vpack.c.bf16 %v367, %v366
        %v369 = vld [vmem:[%s1] sm:$0xf]
        %v370 = vld [vmem:[%s1 + $0x4] sm:$0xf]
        %v371 = vld [vmem:[%s1 + $0x8] sm:$0x3]
        %v372 = vld [vmem:[%s2] sm:$0x1]
        %v374 = vlaneseq
        %v375 = vshrl.u32 %v374, 7
        %v376 = vsub.s32 0, %v375
        %v377 = vrot.slane %v372, %v376
        %v382 = vunpack.c.l.b16 %v369
        %v383 = vunpack.c.l.b16 %v370
        %v384 = vunpack.c.l.b16 %v371
        %v385 = vpack.c.b16 %v383, %v382
        %v386 = vpack.c.b16 %v384, %v384
        %vm388 = vcmask 162816
        %v390 = vsel %vm388, %v368, 0
        %v393 = vsel %vm297, %v386, 0
        %395 = vmatprep.subr.bf16.mxu0 0
        %396 = vmatpush1.bf16.msra.mxu0 0
        %397 = vmatprep.subr.bf16.mxu0 0
        %398 = vmatpush1.bf16.msra.mxu0 0
        %399 = vmatprep.subr.bf16.mxu0 0
        %400 = vmatpush1.bf16.msra.mxu0 0
        %401 = vmatprep.subr.bf16.mxu0 0
        %402 = vmatpush1.bf16.msra.mxu0 0
        %403 = vmatprep.subr.bf16.mxu0 0
        %404 = vmatpush1.bf16.msra.mxu0 0
        %405 = vmatprep.subr.bf16.mxu0 0
        %406 = vmatpush1.bf16.msra.mxu0 0
        %407 = vmatprep.subr.bf16.mxu0 0
        %408 = vmatpush1.bf16.msra.mxu0 %v393
        %409 = vmatprep.subr.bf16.mxu0 0
        %410 = vmatpush1.bf16.msra.mxu0 %v385
        %411 = vmatprep.subr.bf16.mxu0 0
        %412 = vmatpush2.bf16.msra.mxu0 0
        %413 = vmatprep.subr.bf16.mxu0 0
        %414 = vmatpush2.bf16.msra.mxu0 0
        %415 = vmatprep.subr.bf16.mxu0 0
        %416 = vmatpush2.bf16.msra.mxu0 0
        %417 = vmatprep.subr.bf16.mxu0 0
        %418 = vmatpush2.bf16.msra.mxu0 0
        %419 = vmatprep.subr.bf16.mxu0 0
        %420 = vmatpush2.bf16.msra.mxu0 0
        %421 = vmatprep.subr.bf16.mxu0 0
        %422 = vmatpush2.bf16.msra.mxu0 0
        %423 = vmatprep.subr.bf16.mxu0 0
        %424 = vmatpush2.bf16.msra.mxu0 0
        %425 = vmatprep.subr.bf16.mxu0 0
        %426 = vmatpush2.bf16.msra.mxu0 0
        %427 = vmatprep.mubr.bf16.mxu0 0
        %428 = vmatmul.mubr.bf16.gmra.mxu0 %v390
        %v429 = vpop.f32.mrf.mxu0
        %v430 = vadd.f32 %v377, %v429
        %v431 = vpop.f32.mrf.mxu0
        %v432 = vpop.f32.mrf.mxu0
        %v433 = vadd.f32 %v377, %v432
        %v434 = vpop.f32.mrf.mxu0
        %435 = vdwg.mxu0
        %v436 = vmul.f32 %v430, 0.5
        %v437 = vmul.f32 %v433, 0.5
        %v438 = vmul.f32 %v430, 0.044715
        %v439 = vmul.f32 %v433, 0.044715
        %v440 = vmul.f32 %v438, %v430
        %v441 = vmul.f32 %v439, %v433
        %v442 = vmul.f32 %v440, %v430
        %v443 = vmul.f32 %v441, %v433
        %v444 = vadd.f32 %v430, %v442
        %v445 = vadd.f32 %v433, %v443
        %v446 = vmul.f32 %v444, 0.7978846
        %v447 = vmul.f32 %v445, 0.7978846
        %v448 = vtanh.pop %v446
        %v449 = vtanh.pop %v447
        %v450 = vadd.f32 %v448, 1.0
        %v451 = vadd.f32 %v449, 1.0
        %v452 = vmul.f32 %v436, %v450
        %v453 = vmul.f32 %v437, %v451
        %vm456 = vcmask 1040384
        %v457 = vrot.slane %v452, 7
        %v458 = vrot.slane %v453, 7
        %v459 = vsel %vm456, %v457, %v458
        %v463 = vsel %vm456, 0.0, %v457
        %v464 = vsel %vm456, %v458, 0.0
        %v467 = vrot.slane %v463, 1
        %v468 = vrot.slane %v459, 1
        %v469 = vsel %vm308, %v467, %v468
        %v470 = vrot.slane %v464, 1
        %v471 = vsel %vm308, %v468, %v470
        %472 = vrot.lane.b32.xlu0 %v469, 32
        %v473 = vpop.permute.xlu0 %472
        %474 = vrot.lane.b32.xlu0 %v471, 32
        %v475 = vpop.permute.xlu0 %474
        %v478 = vrot.slane %v463, 2
        %v479 = vrot.slane %v459, 2
        %v480 = vsel %vm320, %v478, %v479
        %v481 = vrot.slane %v464, 2
        %v482 = vsel %vm320, %v479, %v481
        %483 = vrot.lane.b32.xlu0 %v480, 64
        %v484 = vpop.permute.xlu0 %483
        %485 = vrot.lane.b32.xlu0 %v482, 64
        %v486 = vpop.permute.xlu0 %485
        %vm489 = vcmask 261120
        %v490 = vsel %vm489, %v463, %v473
        %v491 = vsel %vm489, %v459, %v475
        %vm492 = vcmask 523264
        %v493 = vsel %vm492, %v490, %v484
        %v494 = vsel %vm492, %v491, %v486
        %v495 = vpack.c.bf16 %v494, %v493
        %v496 = vld [vmem:[%s3] sm:$0xf]
        %v497 = vld [vmem:[%s3 + $0x4] sm:$0xf]
        %v498 = vld [vmem:[%s3 + $0x8] sm:$0xf]
        %v499 = vld [vmem:[%s3 + $0xc] sm:$0xf]
        %v500 = vld [vmem:[%s3 + $0x10] sm:$0xf]
        %v501 = vld [vmem:[%s3 + $0x14] sm:$0xf]
        %v502 = vld [vmem:[%s3 + $0x18] sm:$0xf]
        %v503 = vld [vmem:[%s3 + $0x1c] sm:$0xf]
        %v504 = vld [vmem:[%s3 + $0x20] sm:$0xf]
        %v505 = vld [vmem:[%s3 + $0x24] sm:$0xf]
        %v506 = vld [vmem:[%s3 + $0x28] sm:$0xf]
        %v507 = vld [vmem:[%s3 + $0x2c] sm:$0xf]
        %v508 = vld [vmem:[#allocation2] sm:$0x1]
        %v510 = vlaneseq
        %v511 = vshrl.u32 %v510, 7
        %v512 = vsub.s32 0, %v511
        %v513 = vrot.slane %v508, %v512
        %v527 = vunpack.c.l.b16 %v496
        %v528 = vunpack.c.l.b16 %v497
        %v529 = vunpack.c.l.b16 %v498
        %v530 = vunpack.c.l.b16 %v499
        %v531 = vunpack.c.l.b16 %v500
        %v532 = vunpack.c.l.b16 %v501
        %v533 = vunpack.c.l.b16 %v502
        %v534 = vunpack.c.l.b16 %v503
        %v535 = vunpack.c.l.b16 %v504
        %v536 = vunpack.c.l.b16 %v505
        %v537 = vunpack.c.l.b16 %v506
        %v538 = vunpack.c.l.b16 %v507
        %v539 = vpack.c.b16 %v528, %v527
        %v540 = vpack.c.b16 %v530, %v529
        %v541 = vpack.c.b16 %v532, %v531
        %v542 = vpack.c.b16 %v534, %v533
        %v543 = vpack.c.b16 %v536, %v535
        %v544 = vpack.c.b16 %v538, %v537
        %vm551 = vcmask 785408
        %v553 = vsel %vm551, %v495, 0
        %555 = vmatprep.subr.bf16.mxu0 0
        %556 = vmatpush1.bf16.msra.mxu0 0
        %557 = vmatprep.subr.bf16.mxu0 0
        %558 = vmatpush1.bf16.msra.mxu0 0
        %559 = vmatprep.subr.bf16.mxu0 0
        %560 = vmatpush1.bf16.msra.mxu0 %v544
        %561 = vmatprep.subr.bf16.mxu0 0
        %562 = vmatpush1.bf16.msra.mxu0 %v543
        %563 = vmatprep.subr.bf16.mxu0 0
        %564 = vmatpush1.bf16.msra.mxu0 %v542
        %565 = vmatprep.subr.bf16.mxu0 0
        %566 = vmatpush1.bf16.msra.mxu0 %v541
        %567 = vmatprep.subr.bf16.mxu0 0
        %568 = vmatpush1.bf16.msra.mxu0 %v540
        %569 = vmatprep.subr.bf16.mxu0 0
        %570 = vmatpush1.bf16.msra.mxu0 %v539
        %571 = vmatprep.subr.bf16.mxu0 0
        %572 = vmatpush2.bf16.msra.mxu0 0
        %573 = vmatprep.subr.bf16.mxu0 0
        %574 = vmatpush2.bf16.msra.mxu0 0
        %575 = vmatprep.subr.bf16.mxu0 0
        %576 = vmatpush2.bf16.msra.mxu0 0
        %577 = vmatprep.subr.bf16.mxu0 0
        %578 = vmatpush2.bf16.msra.mxu0 0
        %579 = vmatprep.subr.bf16.mxu0 0
        %580 = vmatpush2.bf16.msra.mxu0 0
        %581 = vmatprep.subr.bf16.mxu0 0
        %582 = vmatpush2.bf16.msra.mxu0 0
        %583 = vmatprep.subr.bf16.mxu0 0
        %584 = vmatpush2.bf16.msra.mxu0 0
        %585 = vmatprep.subr.bf16.mxu0 0
        %586 = vmatpush2.bf16.msra.mxu0 0
        %587 = vmatprep.mubr.bf16.mxu0 0
        %588 = vmatmul.mubr.bf16.gmra.mxu0 %v553
        %v589 = vpop.f32.mrf.mxu0
        %v590 = vadd.f32 %v513, %v589
        %v591 = vpop.f32.mrf.mxu0
        %v592 = vpop.f32.mrf.mxu0
        %v593 = vadd.f32 %v513, %v592
        %v594 = vpop.f32.mrf.mxu0
        %595 = vdwg.mxu0
        %v596 = vmul.f32 %v590, 0.5
        %v597 = vmul.f32 %v593, 0.5
        %v598 = vmul.f32 %v590, 0.044715
        %v599 = vmul.f32 %v593, 0.044715
        %v600 = vmul.f32 %v598, %v590
        %v601 = vmul.f32 %v599, %v593
        %v602 = vmul.f32 %v600, %v590
        %v603 = vmul.f32 %v601, %v593
        %v604 = vadd.f32 %v590, %v602
        %v605 = vadd.f32 %v593, %v603
        %v606 = vmul.f32 %v604, 0.7978846
        %v607 = vmul.f32 %v605, 0.7978846
        %v608 = vtanh.pop %v606
        %v609 = vtanh.pop %v607
        %v610 = vadd.f32 %v608, 1.0
        %v611 = vadd.f32 %v609, 1.0
        %v612 = vmul.f32 %v596, %v610
        %v613 = vmul.f32 %v597, %v611
        %v616 = vrot.slane %v612, 7
        %v617 = vrot.slane %v613, 7
        %v618 = vsel %vm456, %v616, %v617
        %v622 = vsel %vm456, 0.0, %v616
        %v623 = vsel %vm456, %v617, 0.0
        %v626 = vrot.slane %v622, 1
        %v627 = vrot.slane %v618, 1
        %v628 = vsel %vm308, %v626, %v627
        %v629 = vrot.slane %v623, 1
        %v630 = vsel %vm308, %v627, %v629
        %631 = vrot.lane.b32.xlu0 %v628, 64
        %v632 = vpop.permute.xlu0 %631
        %633 = vrot.lane.b32.xlu0 %v630, 64
        %v634 = vpop.permute.xlu0 %633
        %v637 = vrot.slane %v622, 2
        %v638 = vrot.slane %v618, 2
        %v639 = vsel %vm320, %v637, %v638
        %v640 = vrot.slane %v623, 2
        %v641 = vsel %vm320, %v638, %v640
        %v644 = vsel %vm492, %v622, %v632
        %v645 = vsel %vm492, %v618, %v634
        %v646 = vpack.c.bf16 %v645, %v644
        %v647 = vpack.c.bf16 %v641, %v639
        %v648 = vld [vmem:[%s5] sm:$0xf]
        %v649 = vld [vmem:[%s5 + $0x4] sm:$0xf]
        %v650 = vld [vmem:[%s5 + $0x8] sm:$0xf]
        %v651 = vld [vmem:[%s5 + $0xc] sm:$0xf]
        %v652 = vld [vmem:[%s5 + $0x10] sm:$0xf]
        %v653 = vld [vmem:[%s5 + $0x14] sm:$0xf]
        %v654 = vld [vmem:[%s5 + $0x18] sm:$0xf]
        %v655 = vld [vmem:[%s5 + $0x1c] sm:$0xf]
        %v656 = vld [vmem:[%s5 + $0x20] sm:$0xf]
        %v657 = vld [vmem:[%s5 + $0x24] sm:$0xf]
        %v658 = vld [vmem:[%s5 + $0x28] sm:$0xf]
        %v659 = vld [vmem:[%s5 + $0x2c] sm:$0xf]
        %v660 = vld [vmem:[%s5 + $0x30] sm:$0xf]
        %v661 = vld [vmem:[%s5 + $0x34] sm:$0xf]
        %v662 = vld [vmem:[%s5 + $0x38] sm:$0xf]
        %v663 = vld [vmem:[%s5 + $0x3c] sm:$0xf]
        %v664 = vld [vmem:[%s5 + $0x40] sm:$0xf]
        %v665 = vld [vmem:[%s5 + $0x44] sm:$0xf]
        %v666 = vld [vmem:[%s5 + $0x48] sm:$0xf]
        %v667 = vld [vmem:[%s5 + $0x4c] sm:$0xf]
        %v668 = vld [vmem:[%s5 + $0x50] sm:$0xf]
        %v669 = vld [vmem:[%s5 + $0x54] sm:$0xf]
        %v670 = vld [vmem:[%s5 + $0x58] sm:$0xf]
        %v671 = vld [vmem:[%s5 + $0x5c] sm:$0xf]
        %v672 = vld [vmem:[%s6] sm:$0x1]
        %v674 = vlaneseq
        %v675 = vshrl.u32 %v674, 7
        %v676 = vsub.s32 0, %v675
        %v677 = vrot.slane %v672, %v676
        %v703 = vunpack.c.l.b16 %v648
        %v704 = vunpack.c.l.b16 %v649
        %v705 = vunpack.c.l.b16 %v650
        %v706 = vunpack.c.l.b16 %v651
        %v707 = vunpack.c.l.b16 %v652
        %v708 = vunpack.c.l.b16 %v653
        %v709 = vunpack.c.l.b16 %v654
        %v710 = vunpack.c.l.b16 %v655
        %v711 = vunpack.c.l.b16 %v656
        %v712 = vunpack.c.l.b16 %v657
        %v713 = vunpack.c.l.b16 %v658
        %v714 = vunpack.c.l.b16 %v659
        %v715 = vunpack.c.l.b16 %v660
        %v716 = vunpack.c.l.b16 %v661
        %v717 = vunpack.c.l.b16 %v662
        %v718 = vunpack.c.l.b16 %v663
        %v719 = vunpack.c.l.b16 %v664
        %v720 = vunpack.c.l.b16 %v665
        %v721 = vunpack.c.l.b16 %v666
        %v722 = vunpack.c.l.b16 %v667
        %v723 = vunpack.c.l.b16 %v668
        %v724 = vunpack.c.l.b16 %v669
        %v725 = vunpack.c.l.b16 %v670
        %v726 = vunpack.c.l.b16 %v671
        %v727 = vpack.c.b16 %v704, %v703
        %v728 = vpack.c.b16 %v706, %v705
        %v729 = vpack.c.b16 %v708, %v707
        %v730 = vpack.c.b16 %v710, %v709
        %v731 = vpack.c.b16 %v712, %v711
        %v732 = vpack.c.b16 %v714, %v713
        %v733 = vpack.c.b16 %v716, %v715
        %v734 = vpack.c.b16 %v718, %v717
        %v735 = vpack.c.b16 %v720, %v719
        %v736 = vpack.c.b16 %v722, %v721
        %v737 = vpack.c.b16 %v724, %v723
        %v738 = vpack.c.b16 %v726, %v725
        %v752 = vsel %vm492, %v647, 0
        %754 = vmatprep.subr.bf16.mxu0 0
        %755 = vmatpush1.bf16.msra.mxu0 %v734
        %756 = vmatprep.subr.bf16.mxu0 0
        %757 = vmatpush1.bf16.msra.mxu0 %v733
        %758 = vmatprep.subr.bf16.mxu0 0
        %759 = vmatpush1.bf16.msra.mxu0 %v732
        %760 = vmatprep.subr.bf16.mxu0 0
        %761 = vmatpush1.bf16.msra.mxu0 %v731
        %762 = vmatprep.subr.bf16.mxu0 0
        %763 = vmatpush1.bf16.msra.mxu0 %v730
        %764 = vmatprep.subr.bf16.mxu0 0
        %765 = vmatpush1.bf16.msra.mxu0 %v729
        %766 = vmatprep.subr.bf16.mxu0 0
        %767 = vmatpush1.bf16.msra.mxu0 %v728
        %768 = vmatprep.subr.bf16.mxu0 0
        %769 = vmatpush1.bf16.msra.mxu0 %v727
        %770 = vmatprep.subr.bf16.mxu0 0
        %771 = vmatpush2.bf16.msra.mxu0 0
        %772 = vmatprep.subr.bf16.mxu0 0
        %773 = vmatpush2.bf16.msra.mxu0 0
        %774 = vmatprep.subr.bf16.mxu0 0
        %775 = vmatpush2.bf16.msra.mxu0 0
        %776 = vmatprep.subr.bf16.mxu0 0
        %777 = vmatpush2.bf16.msra.mxu0 0
        %778 = vmatprep.subr.bf16.mxu0 0
        %779 = vmatpush2.bf16.msra.mxu0 %v738
        %780 = vmatprep.subr.bf16.mxu0 0
        %781 = vmatpush2.bf16.msra.mxu0 %v737
        %782 = vmatprep.subr.bf16.mxu0 0
        %783 = vmatpush2.bf16.msra.mxu0 %v736
        %784 = vmatprep.subr.bf16.mxu0 0
        %785 = vmatpush2.bf16.msra.mxu0 %v735
        %786 = vmatprep.mubr.bf16.mxu0 %v752
        %787 = vmatmul.mubr.bf16.gmra.mxu0 %v646
        %v788 = vpop.f32.mrf.mxu0
        %v789 = vadd.f32 %v677, %v788
        %v790 = vpop.f32.mrf.mxu0
        %v791 = vpop.f32.mrf.mxu0
        %v792 = vadd.f32 %v677, %v791
        %v793 = vpop.f32.mrf.mxu0
        %794 = vdwg.mxu0
        %v795 = vmul.f32 %v789, 0.5
        %v796 = vmul.f32 %v792, 0.5
        %v797 = vmul.f32 %v789, 0.044715
        %v798 = vmul.f32 %v792, 0.044715
        %v799 = vmul.f32 %v797, %v789
        %v800 = vmul.f32 %v798, %v792
        %v801 = vmul.f32 %v799, %v789
        %v802 = vmul.f32 %v800, %v792
        %v803 = vadd.f32 %v789, %v801
        %v804 = vadd.f32 %v792, %v802
        %v805 = vmul.f32 %v803, 0.7978846
        %v806 = vmul.f32 %v804, 0.7978846
        %v807 = vtanh.pop %v805
        %v808 = vtanh.pop %v806
        %v809 = vadd.f32 %v807, 1.0
        %v810 = vadd.f32 %v808, 1.0
        %v811 = vmul.f32 %v795, %v809
        %v812 = vmul.f32 %v796, %v810
        %813 = vst [vmem:[%s284] sm:$0xff] %v811
        %814 = vst [vmem:[%s284 + $0x8] sm:$0xff] %v812
        %s815 = sand.u32 %s182, 1
        %s816 = scalar_lea.sflag [#allocation4], %s815
        %s817 = sand.u32 %s182, 1
        %s818 = smul.addr %s817, 16
        %s819 = scalar_lea.vmem [#allocation5], %s818
        // Predicated region
        $region53: #{tpu_custom_call.1} parent=47 // pred_check
          %p820 = pneg %p192
        $region54: #{tpu_custom_call.1} parent=47 // pred_check_branch
          %822 = sbr.rel (%p820) target = $region56
        $region55: #{tpu_custom_call.1} parent=47 // pred_region
          %s824 = ssub.s32 256, 256
          %825 = vsyncadd %s816, %s824
          %s826 = smul.addr %s22, 2
          %s827 = smul.addr %s826, 128
          %s828 = scalar_lea.hbm %s7, %s827
          %s829 = sshll.u32 %s819, 4
          %s830 = int_to_ptr.vmem [resolvable:$true] %s829
          %835 = dma.vmem_to_hbm [thread:$0]  %s830, 256, %s828, %s816, 128, 128, 8
        $region56: #{tpu_custom_call.1} parent=47 // pred_fallthru
          _
      $region48: #{tpu_custom_call.1} parent=5 // pred_fallthru
        _
      %p836 = scmp.le.s32.totalorder 2, %s17
      // Predicated region
      $region57: #{tpu_custom_call.1} parent=5 // pred_check
        %p837 = pneg %p836
      $region58: #{tpu_custom_call.1} parent=5 // pred_check_branch
        %839 = sbr.rel (%p837) target = $region60
      $region59: #{tpu_custom_call.1} parent=5 // pred_region
        %s840 = ssub.s32 %s17, 2
        // Predicated region
        $region61: #{tpu_custom_call.1} parent=59 // pred_check
          %p841 = pneg %p198
        $region62: #{tpu_custom_call.1} parent=59 // pred_check_branch
          %843 = sbr.rel (%p841) target = $region64
        $region63: #{tpu_custom_call.1} parent=59 // pred_region
          %s844 = sand.u32 %s183, 1
          %s845 = scalar_lea.sflag [#allocation4], %s844
          %s846 = sand.u32 %s183, 1
          %s847 = smul.addr %s846, 16
          %s848 = scalar_lea.vmem [#allocation5], %s847
          %849 = dma.done %s845, 256
        $region64: #{tpu_custom_call.1} parent=59 // pred_fallthru
          _
      $region60: #{tpu_custom_call.1} parent=5 // pred_fallthru
        _
    $region6: #{tpu_custom_call.1} parent=1 // loop_footer
      %s21 = sadd.s32 1, %s17
    $region7: #{tpu_custom_call.1} parent=1 // loop_footer_branch
      %16 = sbr.rel target = $region3
    $region8: #{tpu_custom_call.1} parent=1 // loop_exit
      _
    %850 = vsyncpa [#allocation3], 1
    %s851 = scalar_lea.sflag [#allocation3], 1
    %852 = vsyncpa %s851, 1
    %853 = vsyncpa [#allocation4], 1
    %s854 = scalar_lea.sflag [#allocation4], 1
    %855 = vsyncpa %s854, 1

</llo_original>
